<compile_context>
chip_gen: v5e
topology: v5e:2x2
jax: 0.10.0
libtpu: 0.0.40
codegen_flags: <defaults>
</compile_context>

<pallas_src>
import jax
import jax.numpy as jnp
from jax import lax
from jax.experimental import pallas as pl
from jax.experimental.pallas import tpu as pltpu

INFINITY_NUMBER = 1e12  # constant.INFINITY_NUMBER in the original repo

_Q_DOUBLE_BUFFER_BUDGET = 32 * 1024 * 1024  # cap on the double-buffered q block (VMEM)


def _round_up(x, m):
    return ((x + m - 1) // m) * m


def _choose_tile(n_rows, d, itemsize, tile_n):
    """Lane-aligned row tile, shrunk so the double-buffered q block fits VMEM."""
    d_pad = _round_up(d, 128)
    tile = max(128, _round_up(min(tile_n, max(n_rows, 1)), 128))
    while tile > 128 and 2 * 2 * tile * d_pad * itemsize > _Q_DOUBLE_BUFFER_BUDGET:
        tile = max(128, _round_up(tile // 2, 128))
    return tile


def _global_attention_kernel(q_ref, v_ref, mask_ref, o_ref):
    """q_ref:    (2, TILE_N, D)  q in its streaming dtype (f32 or bf16)
       v_ref:    (8, D)          folded (W.T @ ksum) / |T|, replicated on 8 sublanes,
                                 same dtype as q; grid-resident (constant index_map)
       mask_ref: (1, TILE_N) i8  1 = keep, 0 = masked
       o_ref:    (2, TILE_N) f32 attention weights, lane-dense"""
    keep = mask_ref[...] != 0                                   # (1, TILE_N) bool

    # MXU mat-vec in NT form: (8, D) x (TILE_N, D)^T -> (8, TILE_N), rows identical.
    # Lane-dense result, f32 accumulation; no XLU cross-lane reduce / relayout.
    nt_dims = (((1,), (1,)), ((), ()))
    v = v_ref[...]
    s0 = lax.dot_general(v, q_ref[0], nt_dims, preferred_element_type=jnp.float32)
    s1 = lax.dot_general(v, q_ref[1], nt_dims, preferred_element_type=jnp.float32)

    # 1/|T| is already folded into v, so (s0 - s1) IS the softmax exponent.
    d = (s0 - s1)[0:1, :]                                       # (1, TILE_N)
    d = jnp.minimum(d, 80.0)                                    # keep exp() finite

    # Two-way softmax: w1 = e1/(e0+e1) = 1/(1+exp((s0-s1)/|T|)), w0 = 1 - w1.
    # (Differs from the reference's +1e-10 epsilon by <=1e-10 absolute.)
    den = 1.0 + jnp.exp(d)                                      # EUP
    inv_den = pl.reciprocal(den, approx=True)                   # EUP (cheap)
    inv_den = inv_den * (2.0 - den * inv_den)                   # Newton -> ~f32 accurate
    p1 = inv_den
    p0 = 1.0 - p1

    # Final mask (matches masked_fill(0)); also scrubs NaN/Inf from stale tail rows.
    zero = jnp.zeros_like(p1)
    o_ref[0:1, :] = jnp.where(keep, p0, zero)
    o_ref[1:2, :] = jnp.where(keep, p1, zero)


def global_attention_forward(query, lab_emb, mask, W, b, T, *,
                             tile_n=1024, q_dtype=None, core_parallel=False):
    """query: (2, B, L, D)   lab_emb: (num_labels, D)   mask: (B, L)
       W: (D, D) torch-Linear weight (out, in)   b: (D,)   T: scalar/(1,) parameter
       q_dtype: optional streaming dtype for q (e.g. jnp.bfloat16) -- halves HBM
                traffic; leave None to keep the input dtype (exactly matches f32 ref).
       core_parallel: set True on v7x to shard the row grid across both TensorCores.
       returns attn: (2, B, L) float32"""
    two, B, L, D = query.shape
    assert two == 2
    N = B * L

    # --- Algebraic fold (host-side, O(D*K) work) --------------------------------
    # scores = sum_K((q @ W.T + b) @ key) = q @ (W.T @ ksum) + b.ksum.
    # The bias term is identical for both slices and cancels in the 2-way softmax,
    # so it is dropped; 1/|T| is folded into v so the kernel needs no scalars.
    key = lab_emb.astype(jnp.float32).reshape(D, -1)            # mimics .view(d_model, -1)
    ksum = jnp.sum(key, axis=-1)                                # (D,)
    inv_t = 1.0 / jnp.abs(jnp.asarray(T, jnp.float32)).reshape(())
    v = jnp.matmul(jnp.transpose(W).astype(jnp.float32), ksum) * inv_t   # (D,)

    # --- q stream: no pad, optional bf16 ----------------------------------------
    q = query.reshape(2, N, D)                                  # reshape only; no copy
    if q_dtype is not None:
        q = q.astype(q_dtype)                                   # e.g. bf16: halves HBM stream
    v8 = jnp.broadcast_to(v.reshape(1, D), (8, D)).astype(q.dtype)

    itemsize = jnp.dtype(q.dtype).itemsize
    tile = _choose_tile(N, D, itemsize, tile_n)
    n_blocks = pl.cdiv(N, tile)
    n_out = n_blocks * tile                                     # padded cols: out/mask only

    # Mask / output padding is tiny (1 B + 8 B per row) vs the q stream (D*itemsize/row);
    # q itself is NOT padded -- the last block is a ragged partial-block DMA.
    mask_row = mask.reshape(1, N).astype(jnp.int8)
    if n_out != N:
        mask_row = jnp.pad(mask_row, ((0, 0), (0, n_out - N)))  # pad rows are masked (0)

    # --- VMEM budget / compiler params -------------------------------------------
    d_pad = _round_up(D, 128)
    vmem_needed = (2 * 2 * tile * d_pad * itemsize              # double-buffered q block
                   + 2 * 8 * tile * 4                           # (2, tile) f32 out blocks
                   + 2 * 32 * tile                              # (1, tile) i8 mask blocks
                   + 8 * d_pad * itemsize)                      # resident v8
    vmem_limit = int(min(48 << 20, max(32 << 20, vmem_needed + (2 << 20))))
    sem = (pltpu.CORE_PARALLEL,) if core_parallel else ("parallel",)

    cost = pl.CostEstimate(
        flops=int(4 * N * D),                                   # 2 slices * N rows * D MACs
        transcendentals=int(2 * N),                             # exp + reciprocal per row
        bytes_accessed=int(2 * N * D * itemsize + N + 2 * N * 4),
    )

    out = pl.pallas_call(
        _global_attention_kernel,
        out_shape=jax.ShapeDtypeStruct((2, n_out), jnp.float32),
        grid=(n_blocks,),
        in_specs=[
            pl.BlockSpec((2, tile, D), lambda i: (0, i, 0)),    # q: streamed, double-buffered
            pl.BlockSpec((8, D), lambda i: (0, 0)),             # v8: grid-resident
            pl.BlockSpec((1, tile), lambda i: (0, i)),          # mask (int8)
        ],
        out_specs=pl.BlockSpec((2, tile), lambda i: (0, i)),    # lane-dense output
        compiler_params=pltpu.CompilerParams(
            dimension_semantics=sem, vmem_limit_bytes=vmem_limit),
        cost_estimate=cost,
    )(q, v8, mask_row)

    return out[:, :N].reshape(2, B, L)


def _reference(query, lab_emb, mask, W, b, T):
    """Pure-JAX replica of the PyTorch forward for validation (unfolded math)."""
    two, B, L, D = query.shape
    q = jnp.einsum("sbld,ed->sble", query, W) + b               # Linear
    key = lab_emb.reshape(D, -1)
    scores = jnp.einsum("sbld,dk->sblk", q, key)
    scores = jnp.sum(jnp.swapaxes(scores, -1, -2), axis=-2)     # (2, B, L)
    m = mask[None, :, :]                                        # broadcast over size-2 axis
    data = jnp.where(m == 0, -INFINITY_NUMBER, scores)
    mx = jnp.max(data, axis=0, keepdims=True)
    data = (data - mx) / jnp.abs(T)
    e = jnp.exp(data) + 1e-10
    e = jnp.where(m == 0, 0.0, e)
    den = jnp.sum(e, axis=0, keepdims=True)
    w = jnp.where(m == 0, 0.0, e / den)
    return w


if __name__ == "__main__":
    d_model = 32
    B, L = 2, 8          # nbatches, sequence length
    num_labels = 16

    key0 = jax.random.PRNGKey(0)
    k_q, k_lab, k_w, k_b, k_m = jax.random.split(key0, 5)

    query = jax.random.normal(k_q, (2, B, L, d_model), dtype=jnp.float32)
    lab_emb = jax.random.normal(k_lab, (num_labels, d_model), dtype=jnp.float32)
    W = jax.random.normal(k_w, (d_model, d_model), dtype=jnp.float32) * 0.1
    b = jax.random.normal(k_b, (d_model,), dtype=jnp.float32) * 0.1
    T = jnp.float32(0.1)
    # mask: 1 = keep, 0 = masked (a couple of masked positions)
    mask = (jax.random.uniform(k_m, (B, L)) > 0.2).astype(jnp.float32)

    # TODO(synk): self.dropout is passed to global_attention but never applied
    # in the reference forward path, so it is intentionally a no-op here.

    # f32 streaming path: bit-for-bit comparable to the f32 reference.
    attn = global_attention_forward(query, lab_emb, mask, W, b, T)
    attn = jax.block_until_ready(attn)

    ref = _reference(query, lab_emb, mask, W, b, T)
    assert attn.shape == (2, B, L)
    # The fold + MXU accumulation change f32 rounding slightly and T=0.1 gives 10x
    # error amplification in the exponent, so compare at 1e-4 rather than bit-level.
    assert jnp.allclose(attn, ref, atol=1e-4, rtol=1e-4), "mismatch vs reference"

    # bf16 q-streaming path (halved HBM traffic): smoke test only -- T=0.1 amplifies
    # bf16 quantization of q ~10x in the exponent, so no tight tolerance is asserted.
    attn_bf16 = global_attention_forward(query, lab_emb, mask, W, b, T,
                                         q_dtype=jnp.bfloat16)
    attn_bf16 = jax.block_until_ready(attn_bf16)
    assert attn_bf16.shape == (2, B, L)
    assert bool(jnp.all(jnp.isfinite(attn_bf16)))

    print("KERNEL_OK")
</pallas_src>

<mosaic_0001>
module attributes {stable_mosaic.version = 11 : i64} {
  func.func @_global_attention_kernel(%arg0: i32, %arg1: memref<2x128x32xf32, #tpu.memory_space<vmem>>, %arg2: memref<8x32xf32, #tpu.memory_space<vmem>>, %arg3: memref<1x128xi8, #tpu.memory_space<vmem>>, %arg4: memref<2x128xf32, #tpu.memory_space<vmem>>) attributes {dimension_semantics = [#tpu.dimension_semantics<parallel>], iteration_bounds = array<i64: 1>, scalar_prefetch = 0 : i64, scratch_operands = 0 : i64, tpu.core_type = #tpu.core_type<tc>, window_params = [{transform_indices = @transform_0, window_bounds = array<i64: 2, 128, 32>}, {pipeline_mode = #tpu.pipeline_mode<synchronous>, transform_indices = @transform_1, window_bounds = array<i64: 8, 32>}, {transform_indices = @transform_2, window_bounds = array<i64: 1, 128>}, {transform_indices = @transform_3, window_bounds = array<i64: 2, 128>}]} {
    %c0 = arith.constant 0 : index
    %c0_0 = arith.constant 0 : index
    %0 = vector.load %arg3[%c0, %c0_0] : memref<1x128xi8, #tpu.memory_space<vmem>>, vector<1x128xi8>
    %c0_i8 = arith.constant 0 : i8
    %1 = vector.broadcast %c0_i8 : i8 to vector<1x128xi8>
    %2 = arith.cmpi ne, %0, %1 : vector<1x128xi8>
    %c0_1 = arith.constant 0 : index
    %c0_2 = arith.constant 0 : index
    %3 = vector.load %arg2[%c0_1, %c0_2] : memref<8x32xf32, #tpu.memory_space<vmem>>, vector<8x32xf32>
    %c0_3 = arith.constant 0 : index
    %c0_4 = arith.constant 0 : index
    %c0_5 = arith.constant 0 : index
    %4 = vector.load %arg1[%c0_3, %c0_4, %c0_5] : memref<2x128x32xf32, #tpu.memory_space<vmem>>, vector<1x128x32xf32>
    %5 = vector.shape_cast %4 : vector<1x128x32xf32> to vector<128x32xf32>
    %cst = arith.constant dense<0.000000e+00> : vector<8x128xf32>
    %6 = tpu.matmul %3, %5, %cst {dimension_numbers = #tpu.dot_dimension_numbers<[1], [1], [0], [0], [0, 0, 1, 0], [], []>} : vector<8x32xf32>, vector<128x32xf32>, vector<8x128xf32> -> vector<8x128xf32>
    %c1 = arith.constant 1 : index
    %c0_6 = arith.constant 0 : index
    %c0_7 = arith.constant 0 : index
    %7 = vector.load %arg1[%c1, %c0_6, %c0_7] : memref<2x128x32xf32, #tpu.memory_space<vmem>>, vector<1x128x32xf32>
    %8 = vector.shape_cast %7 : vector<1x128x32xf32> to vector<128x32xf32>
    %cst_8 = arith.constant dense<0.000000e+00> : vector<8x128xf32>
    %9 = tpu.matmul %3, %8, %cst_8 {dimension_numbers = #tpu.dot_dimension_numbers<[1], [1], [0], [0], [0, 0, 1, 0], [], []>} : vector<8x32xf32>, vector<128x32xf32>, vector<8x128xf32> -> vector<8x128xf32>
    %10 = arith.subf %6, %9 : vector<8x128xf32>
    %11 = vector.extract_strided_slice %10 {offsets = [0, 0], sizes = [1, 128], strides = [1, 1]} : vector<8x128xf32> to vector<1x128xf32>
    %cst_9 = arith.constant 8.000000e+01 : f32
    %12 = vector.broadcast %cst_9 : f32 to vector<1x128xf32>
    %13 = arith.minimumf %11, %12 : vector<1x128xf32>
    %14 = math.exp %13 : vector<1x128xf32>
    %cst_10 = arith.constant 1.000000e+00 : f32
    %15 = vector.broadcast %cst_10 : f32 to vector<1x128xf32>
    %16 = arith.addf %15, %14 : vector<1x128xf32>
    %17 = tpu.reciprocal %16 {approx = true} : vector<1x128xf32> -> vector<1x128xf32>
    %18 = arith.mulf %16, %17 : vector<1x128xf32>
    %cst_11 = arith.constant 2.000000e+00 : f32
    %19 = vector.broadcast %cst_11 : f32 to vector<1x128xf32>
    %20 = arith.subf %19, %18 : vector<1x128xf32>
    %21 = arith.mulf %17, %20 : vector<1x128xf32>
    %cst_12 = arith.constant 1.000000e+00 : f32
    %22 = vector.broadcast %cst_12 : f32 to vector<1x128xf32>
    %23 = arith.subf %22, %21 : vector<1x128xf32>
    %cst_13 = arith.constant 0.000000e+00 : f32
    %24 = vector.broadcast %cst_13 : f32 to vector<1x128xf32>
    %25 = arith.select %2, %23, %24 : vector<1x128xi1>, vector<1x128xf32>
    %c0_14 = arith.constant 0 : index
    %c0_15 = arith.constant 0 : index
    %26 = vector.load %arg4[%c0_14, %c0_15] : memref<2x128xf32, #tpu.memory_space<vmem>>, vector<1x128xf32>
    tpu.vector_store %arg4[%c0_14, %c0_15], %25 {strides = array<i32>} : memref<2x128xf32, #tpu.memory_space<vmem>>, vector<1x128xf32>,
    %27 = arith.select %2, %21, %24 : vector<1x128xi1>, vector<1x128xf32>
    %c1_16 = arith.constant 1 : index
    %c0_17 = arith.constant 0 : index
    %28 = vector.load %arg4[%c1_16, %c0_17] : memref<2x128xf32, #tpu.memory_space<vmem>>, vector<1x128xf32>
    tpu.vector_store %arg4[%c1_16, %c0_17], %27 {strides = array<i32>} : memref<2x128xf32, #tpu.memory_space<vmem>>, vector<1x128xf32>,
    return
  }
  func.func @transform_0(%arg0: i32) -> (i32, i32, i32) {
    %c0_i32 = arith.constant 0 : i32
    %c0_i32_0 = arith.constant 0 : i32
    %c0_i32_1 = arith.constant 0 : i32
    return %c0_i32, %arg0, %c0_i32_0 : i32, i32, i32
  }
  func.func @transform_1(%arg0: i32) -> (i32, i32) {
    %c0_i32 = arith.constant 0 : i32
    %c0_i32_0 = arith.constant 0 : i32
    %c0_i32_1 = arith.constant 0 : i32
    return %c0_i32, %c0_i32_0 : i32, i32
  }
  func.func @transform_2(%arg0: i32) -> (i32, i32) {
    %c0_i32 = arith.constant 0 : i32
    %c0_i32_0 = arith.constant 0 : i32
    return %c0_i32, %arg0 : i32, i32
  }
  func.func @transform_3(%arg0: i32) -> (i32, i32) {
    %c0_i32 = arith.constant 0 : i32
    %c0_i32_0 = arith.constant 0 : i32
    return %c0_i32, %arg0 : i32, i32
  }
}

</mosaic_0001>

<llo_original>
// kernel: tpu_custom_call.1
$region0: #{tpu_custom_call.1}
  #allocation0 [shape = 'u32[]', space=smem, size = 0x4, offset = 0x4, fixed_abs, tag = 'smem constant byte address 0x4 - core index']
  #allocation1 [shape = 'u32[72,128]{1,0:T(1,128)}', space=vmem, size = 0x9000, scoped, tag = 'internal scratch']
  #allocation8 [shape = 's32[]', space=sflag, size = 0x4, offset = 0, fixed_abs, tag = 'sflag constant byte address 0x0 - dummy sync flag']
  %s0 = inlined_call_operand.hbm [shape: f32[2,16,32], index: 0, kind: input, shape index: {}]
  %s1 = inlined_call_operand.hbm [shape: f32[8,32], index: 1, kind: input, shape index: {}]
  %s2 = inlined_call_operand.vmem [shape: s8[1,128], index: 2, kind: input, shape index: {}]
  %s3 = inlined_call_operand.hbm [shape: f32[2,128], index: 3, kind: output, shape index: {}]
  %s4 = sld [smem:[#allocation0]]
  $region30: #{tpu_custom_call.1} parent=0
    _
  %s6 = ssub.s32 1, %s4
  %s7 = scalar_select 0, %s6, %s4
  $region1: #{tpu_custom_call.1} parent=0
    #allocation2 [shape = 'u8[131072]{0}', space=vmem, size = 0x20000, scoped, tag = 'input window, operand 0, single buffered']
    #allocation3 [shape = 's32[1]{0}', space=sflag, size = 0x4, scoped, tag = 'scoped memory for tpu_custom_call.1']
    #allocation4 [shape = 's32[1]{0}', space=sflag, size = 0x4, scoped, tag = 'scoped memory for tpu_custom_call.1']
    #allocation5 [shape = 'u8[4096]{0}', space=vmem, size = 0x1000, scoped, tag = 'input window, operand 1, single buffered']
    #allocation6 [shape = 's32[1]{0}', space=sflag, size = 0x4, scoped, tag = 'scoped memory for tpu_custom_call.1']
    #allocation7 [shape = 'u8[1024]{0}', space=vmem, size = 0x400, scoped, tag = 'output window, operand 0, single buffered']
    %8 = vsyncpa [#allocation3], 0
    %9 = vsyncpa [#allocation6], 0
    %10 = vsyncpa [#allocation4], 0
    // Predicated region
    $region2: #{tpu_custom_call.1} parent=1 // pred_check
      _
    $region3: #{tpu_custom_call.1} parent=1 // pred_check_branch
      %12 = sbr.rel (0) target = $region5
    $region4: #{tpu_custom_call.1} parent=1 // pred_region
      #allocation9 [shape = 'u32[6]{0}', space=smem, size = 0x18, scoped, tag = 'DMA stride descriptor']
      %14 = vsyncadd [#allocation3], 3584
      %s16 = sshll.u32 1, 14
      %s17 = sxor.u32 4294967295, %s16
      %s19 = sld [smem:[#allocation0]]
      %s20 = sadd.s32 2, %s19
      %s22 = sshll.u32 7, 26
      %s23 = sxor.u32 4294967295, %s22
      %s24 = sand.u32 0, %s23
      %s25 = sshll.u32 %s20, 26
      %s26 = sor.u32 %s24, %s25
      %s27 = sshll.u32 %s0, 4
      %s28 = int_to_ptr.hbm [resolvable:$true] %s27
      %s29 = sshll.u32 [#allocation2], 4
      %s30 = int_to_ptr.vmem [resolvable:$true] %s29
      %36 = sst [smem:[#allocation9]] 256
      %s37 = scalar_lea.smem [#allocation9], 1
      %38 = sst [smem:[%s37]] 2048
      %s39 = scalar_lea.smem [#allocation9], 2
      %40 = sst [smem:[%s39]] 2
      %s41 = scalar_lea.smem [#allocation9], 3
      %42 = sst [smem:[%s41]] 128
      %s43 = scalar_lea.smem [#allocation9], 4
      %44 = sst [smem:[%s43]] 128
      %s45 = scalar_lea.smem [#allocation9], 5
      %46 = sst [smem:[%s45]] 8
      %48 = dma.general %s28, 512, %s30, [#allocation3], [#allocation8], [#allocation9], %s26, 0
    $region5: #{tpu_custom_call.1} parent=1 // pred_fallthru
      _
    // Predicated region
    $region6: #{tpu_custom_call.1} parent=1 // pred_check
      _
    $region7: #{tpu_custom_call.1} parent=1 // pred_check_branch
      %50 = sbr.rel (0) target = $region9
    $region8: #{tpu_custom_call.1} parent=1 // pred_region
      %52 = vsyncadd [#allocation6], 0
      %s54 = sshll.u32 %s1, 4
      %s55 = int_to_ptr.hbm [resolvable:$true] %s54
      %s56 = sshll.u32 [#allocation5], 4
      %s57 = int_to_ptr.vmem [resolvable:$true] %s56
      %59 = dma.hbm_to_vmem [thread:$0]  %s55, 128, %s57, [#allocation6]
    $region9: #{tpu_custom_call.1} parent=1 // pred_fallthru
      _
    // Predicated region
    $region10: #{tpu_custom_call.1} parent=1 // pred_check
      _
    $region11: #{tpu_custom_call.1} parent=1 // pred_check_branch
      %61 = sbr.rel (0) target = $region13
    $region12: #{tpu_custom_call.1} parent=1 // pred_region
      _
    $region13: #{tpu_custom_call.1} parent=1 // pred_fallthru
      _
    // Predicated region
    $region14: #{tpu_custom_call.1} parent=1 // pred_check
      _
    $region15: #{tpu_custom_call.1} parent=1 // pred_check_branch
      %63 = sbr.rel (0) target = $region17
    $region16: #{tpu_custom_call.1} parent=1 // pred_region
      %65 = dma.done [#allocation3], 4096
    $region17: #{tpu_custom_call.1} parent=1 // pred_fallthru
      _
    // Predicated region
    $region18: #{tpu_custom_call.1} parent=1 // pred_check
      _
    $region19: #{tpu_custom_call.1} parent=1 // pred_check_branch
      %67 = sbr.rel (0) target = $region21
    $region20: #{tpu_custom_call.1} parent=1 // pred_region
      %69 = dma.done [#allocation6], 128
    $region21: #{tpu_custom_call.1} parent=1 // pred_fallthru
      _
    %v72 = vld [vmem:[%s2] sm:$0x1]
    %vm73 = vnez %v72
    %v74 = vld [vmem:[#allocation5] sm:$0xff]
    %v75 = vld [vmem:[#allocation2] sm:$0xff]
    %v76 = vld [vmem:[#allocation2 + $0x8] sm:$0xff]
    %v77 = vld [vmem:[#allocation2 + $0x10] sm:$0xff]
    %v78 = vld [vmem:[#allocation2 + $0x18] sm:$0xff]
    %v79 = vld [vmem:[#allocation2 + $0x20] sm:$0xff]
    %v80 = vld [vmem:[#allocation2 + $0x28] sm:$0xff]
    %v81 = vld [vmem:[#allocation2 + $0x30] sm:$0xff]
    %v82 = vld [vmem:[#allocation2 + $0x38] sm:$0xff]
    %v83 = vld [vmem:[#allocation2 + $0x40] sm:$0xff]
    %v84 = vld [vmem:[#allocation2 + $0x48] sm:$0xff]
    %v85 = vld [vmem:[#allocation2 + $0x50] sm:$0xff]
    %v86 = vld [vmem:[#allocation2 + $0x58] sm:$0xff]
    %v87 = vld [vmem:[#allocation2 + $0x60] sm:$0xff]
    %v88 = vld [vmem:[#allocation2 + $0x68] sm:$0xff]
    %v89 = vld [vmem:[#allocation2 + $0x70] sm:$0xff]
    %v90 = vld [vmem:[#allocation2 + $0x78] sm:$0xff]
    %vm91 = vcmask 261120
    %v93 = vsel %vm91, %v74, 0
    %v96 = vsel %vm91, %v75, 0
    %v99 = vsel %vm91, %v76, 0
    %v102 = vsel %vm91, %v77, 0
    %v105 = vsel %vm91, %v78, 0
    %v108 = vsel %vm91, %v79, 0
    %v111 = vsel %vm91, %v80, 0
    %v114 = vsel %vm91, %v81, 0
    %v117 = vsel %vm91, %v82, 0
    %v120 = vsel %vm91, %v83, 0
    %v123 = vsel %vm91, %v84, 0
    %v126 = vsel %vm91, %v85, 0
    %v129 = vsel %vm91, %v86, 0
    %v132 = vsel %vm91, %v87, 0
    %v135 = vsel %vm91, %v88, 0
    %v138 = vsel %vm91, %v89, 0
    %v141 = vsel %vm91, %v90, 0
    %143 = vmatpush.xpose.msra.mxu0 %v141
    %144 = vmatpush.xpose.msra.mxu0 %v138
    %145 = vmatpush.xpose.msra.mxu0 %v135
    %146 = vmatpush.xpose.msra.mxu0 %v132
    %147 = vmatpush.xpose.msra.mxu0 %v129
    %148 = vmatpush.xpose.msra.mxu0 %v126
    %149 = vmatpush.xpose.msra.mxu0 %v123
    %150 = vmatpush.xpose.msra.mxu0 %v120
    %151 = vmatpush.xpose.msra.mxu0 %v117
    %152 = vmatpush.xpose.msra.mxu0 %v114
    %153 = vmatpush.xpose.msra.mxu0 %v111
    %154 = vmatpush.xpose.msra.mxu0 %v108
    %155 = vmatpush.xpose.msra.mxu0 %v105
    %156 = vmatpush.xpose.msra.mxu0 %v102
    %157 = vmatpush.xpose.msra.mxu0 %v99
    %158 = vmatpush.xpose.msra.mxu0 %v96
    %159 = vmatmul.f32.gmra.mxu0 %v93
    %v160 = vpop.f32.mrf.mxu0
    %v161 = vadd.f32 0.0, %v160
    %162 = vdwg.mxu0
    %s163 = scalar_lea.vmem [#allocation2], 128
    %v164 = vld [vmem:[%s163] sm:$0xff]
    %v165 = vld [vmem:[%s163 + $0x8] sm:$0xff]
    %v166 = vld [vmem:[%s163 + $0x10] sm:$0xff]
    %v167 = vld [vmem:[%s163 + $0x18] sm:$0xff]
    %v168 = vld [vmem:[%s163 + $0x20] sm:$0xff]
    %v169 = vld [vmem:[%s163 + $0x28] sm:$0xff]
    %v170 = vld [vmem:[%s163 + $0x30] sm:$0xff]
    %v171 = vld [vmem:[%s163 + $0x38] sm:$0xff]
    %v172 = vld [vmem:[%s163 + $0x40] sm:$0xff]
    %v173 = vld [vmem:[%s163 + $0x48] sm:$0xff]
    %v174 = vld [vmem:[%s163 + $0x50] sm:$0xff]
    %v175 = vld [vmem:[%s163 + $0x58] sm:$0xff]
    %v176 = vld [vmem:[%s163 + $0x60] sm:$0xff]
    %v177 = vld [vmem:[%s163 + $0x68] sm:$0xff]
    %v178 = vld [vmem:[%s163 + $0x70] sm:$0xff]
    %v179 = vld [vmem:[%s163 + $0x78] sm:$0xff]
    %v181 = vsel %vm91, %v164, 0
    %v184 = vsel %vm91, %v165, 0
    %v187 = vsel %vm91, %v166, 0
    %v190 = vsel %vm91, %v167, 0
    %v193 = vsel %vm91, %v168, 0
    %v196 = vsel %vm91, %v169, 0
    %v199 = vsel %vm91, %v170, 0
    %v202 = vsel %vm91, %v171, 0
    %v205 = vsel %vm91, %v172, 0
    %v208 = vsel %vm91, %v173, 0
    %v211 = vsel %vm91, %v174, 0
    %v214 = vsel %vm91, %v175, 0
    %v217 = vsel %vm91, %v176, 0
    %v220 = vsel %vm91, %v177, 0
    %v223 = vsel %vm91, %v178, 0
    %v226 = vsel %vm91, %v179, 0
    %228 = vmatpush.xpose.msra.mxu0 %v226
    %229 = vmatpush.xpose.msra.mxu0 %v223
    %230 = vmatpush.xpose.msra.mxu0 %v220
    %231 = vmatpush.xpose.msra.mxu0 %v217
    %232 = vmatpush.xpose.msra.mxu0 %v214
    %233 = vmatpush.xpose.msra.mxu0 %v211
    %234 = vmatpush.xpose.msra.mxu0 %v208
    %235 = vmatpush.xpose.msra.mxu0 %v205
    %236 = vmatpush.xpose.msra.mxu0 %v202
    %237 = vmatpush.xpose.msra.mxu0 %v199
    %238 = vmatpush.xpose.msra.mxu0 %v196
    %239 = vmatpush.xpose.msra.mxu0 %v193
    %240 = vmatpush.xpose.msra.mxu0 %v190
    %241 = vmatpush.xpose.msra.mxu0 %v187
    %242 = vmatpush.xpose.msra.mxu0 %v184
    %243 = vmatpush.xpose.msra.mxu0 %v181
    %244 = vmatmul.f32.gmra.mxu0 %v93
    %v245 = vpop.f32.mrf.mxu0
    %v246 = vadd.f32 0.0, %v245
    %247 = vdwg.mxu0
    %v248 = vsub.f32 %v161, %v246
    %v249 = vmin.f32 %v248, 80.0
    %v250 = vmul.f32 %v249, 1.442695
    %v251 = vpow.pop %v250
    %v252 = vadd.f32 %v251, 1.0
    %v253 = vrcp.pop %v252
    %v254 = vmul.f32 %v252, %v253
    %v255 = vsub.f32 2.0, %v254
    %v256 = vmul.f32 %v253, %v255
    %v257 = vsub.f32 1.0, %v256
    %v258 = vsel %vm73, 16843009, 0
    %v259 = vunpack.c.0.s8 %v258
    %vm260 = vcmp.ne.s32.totalorder %v259, 0
    %v261 = vsel %vm260, %v257, 0.0
    %262 = vst [vmem:[#allocation7] sm:$0x1] %v261
    %v263 = vsel %vm260, %v256, 0.0
    %264 = vst [vmem:[#allocation7 + $0x1] sm:$0x1] %v263
    // Predicated region
    $region22: #{tpu_custom_call.1} parent=1 // pred_check
      _
    $region23: #{tpu_custom_call.1} parent=1 // pred_check_branch
      %266 = sbr.rel (0) target = $region25
    $region24: #{tpu_custom_call.1} parent=1 // pred_region
      %268 = vsyncadd [#allocation4], 0
      %s270 = sshll.u32 [#allocation7], 4
      %s271 = int_to_ptr.vmem [resolvable:$true] %s270
      %s272 = sshll.u32 %s3, 4
      %s273 = int_to_ptr.hbm [resolvable:$true] %s272
      %275 = dma.vmem_to_hbm [thread:$0]  %s271, 32, %s273, [#allocation4]
    $region25: #{tpu_custom_call.1} parent=1 // pred_fallthru
      _
    // Predicated region
    $region26: #{tpu_custom_call.1} parent=1 // pred_check
      _
    $region27: #{tpu_custom_call.1} parent=1 // pred_check_branch
      %277 = sbr.rel (0) target = $region29
    $region28: #{tpu_custom_call.1} parent=1 // pred_region
      %279 = dma.done [#allocation4], 32
    $region29: #{tpu_custom_call.1} parent=1 // pred_fallthru
      _
    %280 = vsyncpa [#allocation3], 1
    %281 = vsyncpa [#allocation6], 1
    %282 = vsyncpa [#allocation4], 1

</llo_original>
